<compile_context>
chip_gen: v7x
topology: tpu7x:2x2x1
jax: 0.10.0
libtpu: 0.0.40
codegen_flags: <defaults>
</compile_context>

<pallas_src>
import jax
import jax.numpy as jnp
from jax.experimental import pallas as pl
from jax.experimental.pallas import tpu as pltpu


# ---------------------------------------------------------------------------
# Kernels
# ---------------------------------------------------------------------------

def _addmm_single_kernel(x1_ref, x2_ref, x3_ref, o_ref):
    """Whole problem resident in VMEM: one MXU burst + bias add, no grid loop."""
    acc = jnp.dot(x2_ref[...], x3_ref[...], preferred_element_type=jnp.float32)
    o_ref[...] = (acc + x1_ref[...].astype(jnp.float32)).astype(o_ref.dtype)


def _addmm_f32_kernel(x1_ref, x2_ref, x3_ref, o_ref):
    """Tiled path, f32 output: accumulate directly into the resident output block.

    The output BlockSpec's index_map ignores k, so the (tm, tn) block stays in VMEM
    across the whole reduction; bias is folded into the k == 0 init so the last step
    has no epilogue work beyond the final accumulate.
    """
    @pl.when(pl.program_id(2) == 0)
    def _init():
        o_ref[...] = jnp.broadcast_to(x1_ref[...].astype(jnp.float32), o_ref.shape)

    o_ref[...] += jnp.dot(x2_ref[...], x3_ref[...], preferred_element_type=jnp.float32)


def _addmm_acc_kernel(x1_ref, x2_ref, x3_ref, o_ref, acc_ref):
    """Tiled path, non-f32 output: f32 VMEM accumulator, cast + store on last k."""
    k = pl.program_id(2)

    @pl.when(k == 0)
    def _init():
        acc_ref[...] = jnp.broadcast_to(x1_ref[...].astype(jnp.float32), acc_ref.shape)

    acc_ref[...] += jnp.dot(x2_ref[...], x3_ref[...], preferred_element_type=jnp.float32)

    @pl.when(k == pl.num_programs(2) - 1)
    def _store():
        o_ref[...] = acc_ref[...].astype(o_ref.dtype)


# ---------------------------------------------------------------------------
# Wrapper
# ---------------------------------------------------------------------------

def _round_up(x, m):
    return ((x + m - 1) // m) * m


def _tile_and_pad(dim, pref, align=128):
    """128-aligned tile <= pref, and the padded extent it divides exactly."""
    pref = max(align, (pref // align) * align)
    tile = min(pref, _round_up(dim, align))
    padded = _round_up(dim, tile)
    return tile, padded


def _pad2(a, rows, cols):
    r, c = a.shape
    if r == rows and c == cols:
        return a
    return jnp.pad(a, ((0, rows - r), (0, cols - c)))


def addmm_pallas(x1, x2, x3, *, tm=256, tn=512, tk=512,
                 fast_path_bytes=6 * 1024 * 1024):
    """out = x1 + x2 @ x3  (torch.addmm, beta = alpha = 1) as a Pallas TPU kernel.

    x2: (M, K), x3: (K, N), x1: (M, N), (1, N) or (N,)  (broadcast inside the kernel).
    """
    M, K = x2.shape
    K2, N = x3.shape
    assert K == K2, f"inner dims mismatch: {K} vs {K2}"

    # Normalize bias to 2-D without materializing any broadcast.
    if x1.ndim == 1:
        x1 = x1.reshape(1, -1)
    assert x1.ndim == 2
    m1, n1 = x1.shape
    assert m1 in (1, M) and n1 == N, f"x1 {x1.shape} not broadcastable to {(M, N)}"

    out_dtype = jnp.result_type(x1.dtype, x2.dtype, x3.dtype)
    out_isize = jnp.dtype(out_dtype).itemsize

    # ---- Fast path: whole problem fits well inside scoped VMEM -> single block. ----
    total_bytes = (x1.size * x1.dtype.itemsize + x2.size * x2.dtype.itemsize
                   + x3.size * x3.dtype.itemsize + M * N * out_isize)
    if total_bytes <= fast_path_bytes:
        return pl.pallas_call(
            _addmm_single_kernel,
            out_shape=jax.ShapeDtypeStruct((M, N), out_dtype),
        )(x1, x2, x3)

    # ---- Tiled path: (i, j, k) grid, reduction axis last, padded 128-aligned tiles. ----
    tm, Mp = _tile_and_pad(M, tm)
    tn, Np = _tile_and_pad(N, tn)
    tk, Kp = _tile_and_pad(K, tk)

    # Keep at least two (i, j) output tiles so both v7x TensorCores get work.
    if (Mp // tm) * (Np // tn) == 1:
        if tn % 256 == 0:
            tn //= 2
        elif tm % 256 == 0:
            tm //= 2

    grid = (Mp // tm, Np // tn, Kp // tk)

    x2p = _pad2(x2, Mp, Kp)
    x3p = _pad2(x3, Kp, Np)
    if m1 == 1:
        # Bias strip: one (1, tn) row per output column tile (traffic ~ N, not M*N).
        x1p = _pad2(x1, 1, Np)
        x1_spec = pl.BlockSpec((1, tn), lambda i, j, k: (0, j))
        bias_block_bytes = tn * x1.dtype.itemsize
    else:
        x1p = _pad2(x1, Mp, Np)
        x1_spec = pl.BlockSpec((tm, tn), lambda i, j, k: (i, j))
        bias_block_bytes = tm * tn * x1.dtype.itemsize

    if out_dtype == jnp.float32:
        kernel = _addmm_f32_kernel
        scratch_shapes = []
        acc_bytes = 0
    else:
        kernel = _addmm_acc_kernel
        scratch_shapes = [pltpu.VMEM((tm, tn), jnp.float32)]
        acc_bytes = tm * tn * 4

    # Explicit scoped-VMEM budget from the double-buffered tile footprint.
    vmem_est = 2 * (tm * tk * x2.dtype.itemsize
                    + tk * tn * x3.dtype.itemsize
                    + tm * tn * out_isize
                    + bias_block_bytes) + acc_bytes
    vmem_limit = min(max(int(vmem_est * 1.5), 16 * 1024 * 1024), 48 * 1024 * 1024)

    out_padded = pl.pallas_call(
        kernel,
        out_shape=jax.ShapeDtypeStruct((Mp, Np), out_dtype),
        grid_spec=pltpu.PrefetchScalarGridSpec(
            num_scalar_prefetch=0,
            grid=grid,
            in_specs=[
                x1_spec,
                pl.BlockSpec((tm, tk), lambda i, j, k: (i, k)),
                pl.BlockSpec((tk, tn), lambda i, j, k: (k, j)),
            ],
            out_specs=pl.BlockSpec((tm, tn), lambda i, j, k: (i, j)),
            scratch_shapes=scratch_shapes,
        ),
        compiler_params=pltpu.CompilerParams(
            dimension_semantics=("parallel", "parallel", "arbitrary"),
            vmem_limit_bytes=vmem_limit,
        ),
    )(x1p, x2p, x3p)

    if (Mp, Np) != (M, N):
        return out_padded[:M, :N]
    return out_padded


def model_forward(x1, x2, x3):
    v1 = addmm_pallas(x1, x2, x3)
    # torch.cat([v1], dim=1) with a single tensor is the identity -> return v1 directly.
    return v1


if __name__ == "__main__":
    key = jax.random.PRNGKey(0)
    k1, k2, k3, k4, k5, k6, k7 = jax.random.split(key, 7)

    # --- Case 1: small, aligned shape -> single-block fast path, full (M, N) bias. ---
    M, K, N = 256, 256, 256
    x2 = jax.random.normal(k2, (M, K), dtype=jnp.float32)
    x3 = jax.random.normal(k3, (K, N), dtype=jnp.float32)
    x1_full = jax.random.normal(k1, (M, N), dtype=jnp.float32)
    out_full = jax.block_until_ready(model_forward(x1_full, x2, x3))
    ref_full = x1_full + x2 @ x3
    assert out_full.shape == (M, N)
    assert jnp.allclose(out_full, ref_full, atol=5e-4, rtol=5e-4)

    # --- Case 2: (1, N) bias vector broadcast inside the kernel. ---
    x1_vec = jax.random.normal(k4, (1, N), dtype=jnp.float32)
    out_vec = jax.block_until_ready(model_forward(x1_vec, x2, x3))
    ref_vec = x1_vec + x2 @ x3
    assert out_vec.shape == (M, N)
    assert jnp.allclose(out_vec, ref_vec, atol=5e-4, rtol=5e-4)

    # --- Case 3: larger, non-tile-aligned shape -> tiled path with padding + slicing. ---
    M2, K2, N2 = 640, 1030, 900
    x2b = jax.random.normal(k5, (M2, K2), dtype=jnp.float32)
    x3b = jax.random.normal(k6, (K2, N2), dtype=jnp.float32)
    x1b = jax.random.normal(k7, (M2, N2), dtype=jnp.float32)
    out_b = jax.block_until_ready(model_forward(x1b, x2b, x3b))
    ref_b = x1b + x2b @ x3b
    assert out_b.shape == (M2, N2)
    assert jnp.allclose(out_b, ref_b, atol=2e-3, rtol=2e-3)

    print("KERNEL_OK")
</pallas_src>

<mosaic_0001>
module attributes {stable_mosaic.version = 11 : i64} {
  func.func @_addmm_single_kernel(%arg0: memref<256x256xf32, #tpu.memory_space<vmem>>, %arg1: memref<256x256xf32, #tpu.memory_space<vmem>>, %arg2: memref<256x256xf32, #tpu.memory_space<vmem>>, %arg3: memref<256x256xf32, #tpu.memory_space<vmem>>) attributes {dimension_semantics = [], scalar_prefetch = 0 : i64, scratch_operands = 0 : i64, tpu.core_type = #tpu.core_type<tc>} {
    %c0 = arith.constant 0 : index
    %c0_0 = arith.constant 0 : index
    %0 = vector.load %arg1[%c0, %c0_0] : memref<256x256xf32, #tpu.memory_space<vmem>>, vector<256x256xf32>
    %c0_1 = arith.constant 0 : index
    %c0_2 = arith.constant 0 : index
    %1 = vector.load %arg2[%c0_1, %c0_2] : memref<256x256xf32, #tpu.memory_space<vmem>>, vector<256x256xf32>
    %cst = arith.constant dense<0.000000e+00> : vector<256x256xf32>
    %2 = tpu.matmul %0, %1, %cst {dimension_numbers = #tpu.dot_dimension_numbers<[1], [0], [0], [1], [0, 0, 1, 1], [], []>} : vector<256x256xf32>, vector<256x256xf32>, vector<256x256xf32> -> vector<256x256xf32>
    %c0_3 = arith.constant 0 : index
    %c0_4 = arith.constant 0 : index
    %3 = vector.load %arg0[%c0_3, %c0_4] : memref<256x256xf32, #tpu.memory_space<vmem>>, vector<256x256xf32>
    %4 = arith.addf %2, %3 : vector<256x256xf32>
    %c0_5 = arith.constant 0 : index
    %c0_6 = arith.constant 0 : index
    %5 = vector.load %arg3[%c0_5, %c0_6] : memref<256x256xf32, #tpu.memory_space<vmem>>, vector<256x256xf32>
    tpu.vector_store %arg3[%c0_5, %c0_6], %4 {strides = array<i32>} : memref<256x256xf32, #tpu.memory_space<vmem>>, vector<256x256xf32>,
    return
  }
}

</mosaic_0001>

<llo_original>
// kernel: tpu_custom_call.1
$region0: #{tpu_custom_call.1}
  #allocation0 [shape = 'u32[]', space=smem, size = 0x4, offset = 0x4, fixed_abs, tag = 'smem constant byte address 0x4 - core index']
  #allocation1 [shape = 'u32[144,128]{1,0:T(1,128)}', space=vmem, size = 0x12000, scoped, tag = 'internal scratch']
  %s0 = inlined_call_operand.hbm [shape: f32[256,256], index: 0, kind: input, shape index: {}]
  %s1 = inlined_call_operand.hbm [shape: f32[256,256], index: 1, kind: input, shape index: {}]
  %s2 = inlined_call_operand.hbm [shape: f32[256,256], index: 2, kind: input, shape index: {}]
  %s3 = inlined_call_operand.hbm [shape: f32[256,256], index: 3, kind: output, shape index: {}]
  %s4 = sld [smem:[#allocation0]]
  $region34: #{tpu_custom_call.1} parent=0
    _
  %s6 = ssub.s32 1, %s4
  %s7 = scalar_select 0, %s6, %s4
  $region1: #{tpu_custom_call.1} parent=0
    #allocation2 [shape = 'u8[262144]{0}', space=vmem, size = 0x40000, scoped, tag = 'input window, operand 0, single buffered']
    #allocation3 [shape = 's32[1]{0}', space=sflag, size = 0x4, scoped, tag = 'scoped memory for tpu_custom_call.1']
    #allocation4 [shape = 's32[1]{0}', space=sflag, size = 0x4, scoped, tag = 'scoped memory for tpu_custom_call.1']
    #allocation5 [shape = 'u8[262144]{0}', space=vmem, size = 0x40000, scoped, tag = 'input window, operand 1, single buffered']
    #allocation6 [shape = 's32[1]{0}', space=sflag, size = 0x4, scoped, tag = 'scoped memory for tpu_custom_call.1']
    #allocation7 [shape = 'u8[262144]{0}', space=vmem, size = 0x40000, scoped, tag = 'input window, operand 2, single buffered']
    #allocation8 [shape = 'u8[262144]{0}', space=vmem, size = 0x40000, scoped, tag = 'output window, operand 0, single buffered']
    %8 = vsyncpa [#allocation3], 0
    %9 = vsyncpa [#allocation6], 0
    %10 = vsyncpa [#allocation4], 0
    // Predicated region
    $region2: #{tpu_custom_call.1} parent=1 // pred_check
      _
    $region3: #{tpu_custom_call.1} parent=1 // pred_check_branch
      %12 = sbr.rel (0) target = $region5
    $region4: #{tpu_custom_call.1} parent=1 // pred_region
      %s14 = ssub.s32 8192, 8192
      %15 = vsyncadd [#allocation3], %s14
      %s16 = sshll.u32 [#allocation2], 4
      %s17 = int_to_ptr.vmem [resolvable:$true] %s16
      %22 = dma.hbm_to_vmem [thread:$0]  %s0, 8192, %s17, [#allocation3], 256, 256, 16
    $region5: #{tpu_custom_call.1} parent=1 // pred_fallthru
      _
    // Predicated region
    $region6: #{tpu_custom_call.1} parent=1 // pred_check
      _
    $region7: #{tpu_custom_call.1} parent=1 // pred_check_branch
      %24 = sbr.rel (0) target = $region9
    $region8: #{tpu_custom_call.1} parent=1 // pred_region
      %s26 = ssub.s32 8192, 8192
      %27 = vsyncadd [#allocation6], %s26
      %s28 = sshll.u32 [#allocation5], 4
      %s29 = int_to_ptr.vmem [resolvable:$true] %s28
      %34 = dma.hbm_to_vmem [thread:$0]  %s1, 8192, %s29, [#allocation6], 256, 256, 16
    $region9: #{tpu_custom_call.1} parent=1 // pred_fallthru
      _
    // Predicated region
    $region10: #{tpu_custom_call.1} parent=1 // pred_check
      _
    $region11: #{tpu_custom_call.1} parent=1 // pred_check_branch
      %36 = sbr.rel (0) target = $region13
    $region12: #{tpu_custom_call.1} parent=1 // pred_region
      %s38 = ssub.s32 8192, 8192
      %39 = vsyncadd [#allocation6], %s38
      %s40 = sshll.u32 [#allocation7], 4
      %s41 = int_to_ptr.vmem [resolvable:$true] %s40
      %46 = dma.hbm_to_vmem [thread:$0]  %s2, 8192, %s41, [#allocation6], 256, 256, 16
    $region13: #{tpu_custom_call.1} parent=1 // pred_fallthru
      _
    // Predicated region
    $region14: #{tpu_custom_call.1} parent=1 // pred_check
      _
    $region15: #{tpu_custom_call.1} parent=1 // pred_check_branch
      %48 = sbr.rel (0) target = $region17
    $region16: #{tpu_custom_call.1} parent=1 // pred_region
      %49 = dma.done [#allocation3], 8192
    $region17: #{tpu_custom_call.1} parent=1 // pred_fallthru
      _
    // Predicated region
    $region18: #{tpu_custom_call.1} parent=1 // pred_check
      _
    $region19: #{tpu_custom_call.1} parent=1 // pred_check_branch
      %51 = sbr.rel (0) target = $region21
    $region20: #{tpu_custom_call.1} parent=1 // pred_region
      %52 = dma.done [#allocation6], 8192
    $region21: #{tpu_custom_call.1} parent=1 // pred_fallthru
      _
    // Predicated region
    $region22: #{tpu_custom_call.1} parent=1 // pred_check
      _
    $region23: #{tpu_custom_call.1} parent=1 // pred_check_branch
      %54 = sbr.rel (0) target = $region25
    $region24: #{tpu_custom_call.1} parent=1 // pred_region
      %55 = dma.done [#allocation6], 8192
    $region25: #{tpu_custom_call.1} parent=1 // pred_fallthru
      _
    %v56 = vld [vmem:[#allocation5] sm:$0xff]
    %v57 = vld [vmem:[#allocation5 + $0x8] sm:$0xff]
    %v58 = vld [vmem:[#allocation5 + $0x10] sm:$0xff]
    %v59 = vld [vmem:[#allocation5 + $0x18] sm:$0xff]
    %v60 = vld [vmem:[#allocation5 + $0x20] sm:$0xff]
    %v61 = vld [vmem:[#allocation5 + $0x28] sm:$0xff]
    %v62 = vld [vmem:[#allocation5 + $0x30] sm:$0xff]
    %v63 = vld [vmem:[#allocation5 + $0x38] sm:$0xff]
    %v64 = vld [vmem:[#allocation5 + $0x40] sm:$0xff]
    %v65 = vld [vmem:[#allocation5 + $0x48] sm:$0xff]
    %v66 = vld [vmem:[#allocation5 + $0x50] sm:$0xff]
    %v67 = vld [vmem:[#allocation5 + $0x58] sm:$0xff]
    %v68 = vld [vmem:[#allocation5 + $0x60] sm:$0xff]
    %v69 = vld [vmem:[#allocation5 + $0x68] sm:$0xff]
    %v70 = vld [vmem:[#allocation5 + $0x70] sm:$0xff]
    %v71 = vld [vmem:[#allocation5 + $0x78] sm:$0xff]
    %v72 = vld [vmem:[#allocation5 + $0x80] sm:$0xff]
    %v73 = vld [vmem:[#allocation5 + $0x88] sm:$0xff]
    %v74 = vld [vmem:[#allocation5 + $0x90] sm:$0xff]
    %v75 = vld [vmem:[#allocation5 + $0x98] sm:$0xff]
    %v76 = vld [vmem:[#allocation5 + $0xa0] sm:$0xff]
    %v77 = vld [vmem:[#allocation5 + $0xa8] sm:$0xff]
    %v78 = vld [vmem:[#allocation5 + $0xb0] sm:$0xff]
    %v79 = vld [vmem:[#allocation5 + $0xb8] sm:$0xff]
    %v80 = vld [vmem:[#allocation5 + $0xc0] sm:$0xff]
    %v81 = vld [vmem:[#allocation5 + $0xc8] sm:$0xff]
    %v82 = vld [vmem:[#allocation5 + $0xd0] sm:$0xff]
    %v83 = vld [vmem:[#allocation5 + $0xd8] sm:$0xff]
    %v84 = vld [vmem:[#allocation5 + $0xe0] sm:$0xff]
    %v85 = vld [vmem:[#allocation5 + $0xe8] sm:$0xff]
    %v86 = vld [vmem:[#allocation5 + $0xf0] sm:$0xff]
    %v87 = vld [vmem:[#allocation5 + $0xf8] sm:$0xff]
    %v88 = vld [vmem:[#allocation5 + $0x100] sm:$0xff]
    %v89 = vld [vmem:[#allocation5 + $0x108] sm:$0xff]
    %v90 = vld [vmem:[#allocation5 + $0x110] sm:$0xff]
    %v91 = vld [vmem:[#allocation5 + $0x118] sm:$0xff]
    %v92 = vld [vmem:[#allocation5 + $0x120] sm:$0xff]
    %v93 = vld [vmem:[#allocation5 + $0x128] sm:$0xff]
    %v94 = vld [vmem:[#allocation5 + $0x130] sm:$0xff]
    %v95 = vld [vmem:[#allocation5 + $0x138] sm:$0xff]
    %v96 = vld [vmem:[#allocation5 + $0x140] sm:$0xff]
    %v97 = vld [vmem:[#allocation5 + $0x148] sm:$0xff]
    %v98 = vld [vmem:[#allocation5 + $0x150] sm:$0xff]
    %v99 = vld [vmem:[#allocation5 + $0x158] sm:$0xff]
    %v100 = vld [vmem:[#allocation5 + $0x160] sm:$0xff]
    %v101 = vld [vmem:[#allocation5 + $0x168] sm:$0xff]
    %v102 = vld [vmem:[#allocation5 + $0x170] sm:$0xff]
    %v103 = vld [vmem:[#allocation5 + $0x178] sm:$0xff]
    %v104 = vld [vmem:[#allocation5 + $0x180] sm:$0xff]
    %v105 = vld [vmem:[#allocation5 + $0x188] sm:$0xff]
    %v106 = vld [vmem:[#allocation5 + $0x190] sm:$0xff]
    %v107 = vld [vmem:[#allocation5 + $0x198] sm:$0xff]
    %v108 = vld [vmem:[#allocation5 + $0x1a0] sm:$0xff]
    %v109 = vld [vmem:[#allocation5 + $0x1a8] sm:$0xff]
    %v110 = vld [vmem:[#allocation5 + $0x1b0] sm:$0xff]
    %v111 = vld [vmem:[#allocation5 + $0x1b8] sm:$0xff]
    %v112 = vld [vmem:[#allocation5 + $0x1c0] sm:$0xff]
    %v113 = vld [vmem:[#allocation5 + $0x1c8] sm:$0xff]
    %v114 = vld [vmem:[#allocation5 + $0x1d0] sm:$0xff]
    %v115 = vld [vmem:[#allocation5 + $0x1d8] sm:$0xff]
    %v116 = vld [vmem:[#allocation5 + $0x1e0] sm:$0xff]
    %v117 = vld [vmem:[#allocation5 + $0x1e8] sm:$0xff]
    %v118 = vld [vmem:[#allocation5 + $0x1f0] sm:$0xff]
    %v119 = vld [vmem:[#allocation5 + $0x1f8] sm:$0xff]
    %v120 = vld [vmem:[#allocation7] sm:$0xff]
    %v121 = vld [vmem:[#allocation7 + $0x8] sm:$0xff]
    %v122 = vld [vmem:[#allocation7 + $0x10] sm:$0xff]
    %v123 = vld [vmem:[#allocation7 + $0x18] sm:$0xff]
    %v124 = vld [vmem:[#allocation7 + $0x20] sm:$0xff]
    %v125 = vld [vmem:[#allocation7 + $0x28] sm:$0xff]
    %v126 = vld [vmem:[#allocation7 + $0x30] sm:$0xff]
    %v127 = vld [vmem:[#allocation7 + $0x38] sm:$0xff]
    %v128 = vld [vmem:[#allocation7 + $0x40] sm:$0xff]
    %v129 = vld [vmem:[#allocation7 + $0x48] sm:$0xff]
    %v130 = vld [vmem:[#allocation7 + $0x50] sm:$0xff]
    %v131 = vld [vmem:[#allocation7 + $0x58] sm:$0xff]
    %v132 = vld [vmem:[#allocation7 + $0x60] sm:$0xff]
    %v133 = vld [vmem:[#allocation7 + $0x68] sm:$0xff]
    %v134 = vld [vmem:[#allocation7 + $0x70] sm:$0xff]
    %v135 = vld [vmem:[#allocation7 + $0x78] sm:$0xff]
    %v136 = vld [vmem:[#allocation7 + $0x80] sm:$0xff]
    %v137 = vld [vmem:[#allocation7 + $0x88] sm:$0xff]
    %v138 = vld [vmem:[#allocation7 + $0x90] sm:$0xff]
    %v139 = vld [vmem:[#allocation7 + $0x98] sm:$0xff]
    %v140 = vld [vmem:[#allocation7 + $0xa0] sm:$0xff]
    %v141 = vld [vmem:[#allocation7 + $0xa8] sm:$0xff]
    %v142 = vld [vmem:[#allocation7 + $0xb0] sm:$0xff]
    %v143 = vld [vmem:[#allocation7 + $0xb8] sm:$0xff]
    %v144 = vld [vmem:[#allocation7 + $0xc0] sm:$0xff]
    %v145 = vld [vmem:[#allocation7 + $0xc8] sm:$0xff]
    %v146 = vld [vmem:[#allocation7 + $0xd0] sm:$0xff]
    %v147 = vld [vmem:[#allocation7 + $0xd8] sm:$0xff]
    %v148 = vld [vmem:[#allocation7 + $0xe0] sm:$0xff]
    %v149 = vld [vmem:[#allocation7 + $0xe8] sm:$0xff]
    %v150 = vld [vmem:[#allocation7 + $0xf0] sm:$0xff]
    %v151 = vld [vmem:[#allocation7 + $0xf8] sm:$0xff]
    %v152 = vld [vmem:[#allocation7 + $0x100] sm:$0xff]
    %v153 = vld [vmem:[#allocation7 + $0x108] sm:$0xff]
    %v154 = vld [vmem:[#allocation7 + $0x110] sm:$0xff]
    %v155 = vld [vmem:[#allocation7 + $0x118] sm:$0xff]
    %v156 = vld [vmem:[#allocation7 + $0x120] sm:$0xff]
    %v157 = vld [vmem:[#allocation7 + $0x128] sm:$0xff]
    %v158 = vld [vmem:[#allocation7 + $0x130] sm:$0xff]
    %v159 = vld [vmem:[#allocation7 + $0x138] sm:$0xff]
    %v160 = vld [vmem:[#allocation7 + $0x140] sm:$0xff]
    %v161 = vld [vmem:[#allocation7 + $0x148] sm:$0xff]
    %v162 = vld [vmem:[#allocation7 + $0x150] sm:$0xff]
    %v163 = vld [vmem:[#allocation7 + $0x158] sm:$0xff]
    %v164 = vld [vmem:[#allocation7 + $0x160] sm:$0xff]
    %v165 = vld [vmem:[#allocation7 + $0x168] sm:$0xff]
    %v166 = vld [vmem:[#allocation7 + $0x170] sm:$0xff]
    %v167 = vld [vmem:[#allocation7 + $0x178] sm:$0xff]
    %v168 = vld [vmem:[#allocation7 + $0x180] sm:$0xff]
    %v169 = vld [vmem:[#allocation7 + $0x188] sm:$0xff]
    %v170 = vld [vmem:[#allocation7 + $0x190] sm:$0xff]
    %v171 = vld [vmem:[#allocation7 + $0x198] sm:$0xff]
    %v172 = vld [vmem:[#allocation7 + $0x1a0] sm:$0xff]
    %v173 = vld [vmem:[#allocation7 + $0x1a8] sm:$0xff]
    %v174 = vld [vmem:[#allocation7 + $0x1b0] sm:$0xff]
    %v175 = vld [vmem:[#allocation7 + $0x1b8] sm:$0xff]
    %v176 = vld [vmem:[#allocation7 + $0x1c0] sm:$0xff]
    %v177 = vld [vmem:[#allocation7 + $0x1c8] sm:$0xff]
    %v178 = vld [vmem:[#allocation7 + $0x1d0] sm:$0xff]
    %v179 = vld [vmem:[#allocation7 + $0x1d8] sm:$0xff]
    %v180 = vld [vmem:[#allocation7 + $0x1e0] sm:$0xff]
    %v181 = vld [vmem:[#allocation7 + $0x1e8] sm:$0xff]
    %v182 = vld [vmem:[#allocation7 + $0x1f0] sm:$0xff]
    %v183 = vld [vmem:[#allocation7 + $0x1f8] sm:$0xff]
    %v184 = vld [vmem:[#allocation2] sm:$0xff]
    %v185 = vld [vmem:[#allocation2 + $0x8] sm:$0xff]
    %v186 = vld [vmem:[#allocation2 + $0x10] sm:$0xff]
    %v187 = vld [vmem:[#allocation2 + $0x18] sm:$0xff]
    %v188 = vld [vmem:[#allocation2 + $0x20] sm:$0xff]
    %v189 = vld [vmem:[#allocation2 + $0x28] sm:$0xff]
    %v190 = vld [vmem:[#allocation2 + $0x30] sm:$0xff]
    %v191 = vld [vmem:[#allocation2 + $0x38] sm:$0xff]
    %v192 = vld [vmem:[#allocation2 + $0x40] sm:$0xff]
    %v193 = vld [vmem:[#allocation2 + $0x48] sm:$0xff]
    %v194 = vld [vmem:[#allocation2 + $0x50] sm:$0xff]
    %v195 = vld [vmem:[#allocation2 + $0x58] sm:$0xff]
    %v196 = vld [vmem:[#allocation2 + $0x60] sm:$0xff]
    %v197 = vld [vmem:[#allocation2 + $0x68] sm:$0xff]
    %v198 = vld [vmem:[#allocation2 + $0x70] sm:$0xff]
    %v199 = vld [vmem:[#allocation2 + $0x78] sm:$0xff]
    %v200 = vld [vmem:[#allocation2 + $0x80] sm:$0xff]
    %v201 = vld [vmem:[#allocation2 + $0x88] sm:$0xff]
    %v202 = vld [vmem:[#allocation2 + $0x90] sm:$0xff]
    %v203 = vld [vmem:[#allocation2 + $0x98] sm:$0xff]
    %v204 = vld [vmem:[#allocation2 + $0xa0] sm:$0xff]
    %v205 = vld [vmem:[#allocation2 + $0xa8] sm:$0xff]
    %v206 = vld [vmem:[#allocation2 + $0xb0] sm:$0xff]
    %v207 = vld [vmem:[#allocation2 + $0xb8] sm:$0xff]
    %v208 = vld [vmem:[#allocation2 + $0xc0] sm:$0xff]
    %v209 = vld [vmem:[#allocation2 + $0xc8] sm:$0xff]
    %v210 = vld [vmem:[#allocation2 + $0xd0] sm:$0xff]
    %v211 = vld [vmem:[#allocation2 + $0xd8] sm:$0xff]
    %v212 = vld [vmem:[#allocation2 + $0xe0] sm:$0xff]
    %v213 = vld [vmem:[#allocation2 + $0xe8] sm:$0xff]
    %v214 = vld [vmem:[#allocation2 + $0xf0] sm:$0xff]
    %v215 = vld [vmem:[#allocation2 + $0xf8] sm:$0xff]
    %v216 = vld [vmem:[#allocation2 + $0x100] sm:$0xff]
    %v217 = vld [vmem:[#allocation2 + $0x108] sm:$0xff]
    %v218 = vld [vmem:[#allocation2 + $0x110] sm:$0xff]
    %v219 = vld [vmem:[#allocation2 + $0x118] sm:$0xff]
    %v220 = vld [vmem:[#allocation2 + $0x120] sm:$0xff]
    %v221 = vld [vmem:[#allocation2 + $0x128] sm:$0xff]
    %v222 = vld [vmem:[#allocation2 + $0x130] sm:$0xff]
    %v223 = vld [vmem:[#allocation2 + $0x138] sm:$0xff]
    %v224 = vld [vmem:[#allocation2 + $0x140] sm:$0xff]
    %v225 = vld [vmem:[#allocation2 + $0x148] sm:$0xff]
    %v226 = vld [vmem:[#allocation2 + $0x150] sm:$0xff]
    %v227 = vld [vmem:[#allocation2 + $0x158] sm:$0xff]
    %v228 = vld [vmem:[#allocation2 + $0x160] sm:$0xff]
    %v229 = vld [vmem:[#allocation2 + $0x168] sm:$0xff]
    %v230 = vld [vmem:[#allocation2 + $0x170] sm:$0xff]
    %v231 = vld [vmem:[#allocation2 + $0x178] sm:$0xff]
    %v232 = vld [vmem:[#allocation2 + $0x180] sm:$0xff]
    %v233 = vld [vmem:[#allocation2 + $0x188] sm:$0xff]
    %v234 = vld [vmem:[#allocation2 + $0x190] sm:$0xff]
    %v235 = vld [vmem:[#allocation2 + $0x198] sm:$0xff]
    %v236 = vld [vmem:[#allocation2 + $0x1a0] sm:$0xff]
    %v237 = vld [vmem:[#allocation2 + $0x1a8] sm:$0xff]
    %v238 = vld [vmem:[#allocation2 + $0x1b0] sm:$0xff]
    %v239 = vld [vmem:[#allocation2 + $0x1b8] sm:$0xff]
    %v240 = vld [vmem:[#allocation2 + $0x1c0] sm:$0xff]
    %v241 = vld [vmem:[#allocation2 + $0x1c8] sm:$0xff]
    %v242 = vld [vmem:[#allocation2 + $0x1d0] sm:$0xff]
    %v243 = vld [vmem:[#allocation2 + $0x1d8] sm:$0xff]
    %v244 = vld [vmem:[#allocation2 + $0x1e0] sm:$0xff]
    %v245 = vld [vmem:[#allocation2 + $0x1e8] sm:$0xff]
    %v246 = vld [vmem:[#allocation2 + $0x1f0] sm:$0xff]
    %v247 = vld [vmem:[#allocation2 + $0x1f8] sm:$0xff]
    %248 = vmatprep.subr.mxu0 %v121
    %249 = vmatpush1.msra.mxu0 %v120
    %250 = vmatprep.subr.mxu0 %v123
    %251 = vmatpush1.msra.mxu0 %v122
    %252 = vmatprep.subr.mxu0 %v125
    %253 = vmatpush1.msra.mxu0 %v124
    %254 = vmatprep.subr.mxu0 %v127
    %255 = vmatpush1.msra.mxu0 %v126
    %256 = vmatprep.subr.mxu0 %v129
    %257 = vmatpush1.msra.mxu0 %v128
    %258 = vmatprep.subr.mxu0 %v131
    %259 = vmatpush1.msra.mxu0 %v130
    %260 = vmatprep.subr.mxu0 %v133
    %261 = vmatpush1.msra.mxu0 %v132
    %262 = vmatprep.subr.mxu0 %v135
    %263 = vmatpush1.msra.mxu0 %v134
    %264 = vmatprep.subr.mxu0 %v137
    %265 = vmatpush1.msra.mxu0 %v136
    %266 = vmatprep.subr.mxu0 %v139
    %267 = vmatpush1.msra.mxu0 %v138
    %268 = vmatprep.subr.mxu0 %v141
    %269 = vmatpush1.msra.mxu0 %v140
    %270 = vmatprep.subr.mxu0 %v143
    %271 = vmatpush1.msra.mxu0 %v142
    %272 = vmatprep.subr.mxu0 %v145
    %273 = vmatpush1.msra.mxu0 %v144
    %274 = vmatprep.subr.mxu0 %v147
    %275 = vmatpush1.msra.mxu0 %v146
    %276 = vmatprep.subr.mxu0 %v149
    %277 = vmatpush1.msra.mxu0 %v148
    %278 = vmatprep.subr.mxu0 %v151
    %279 = vmatpush1.msra.mxu0 %v150
    %280 = vmatprep.subr.mxu0 %v153
    %281 = vmatpush1.msra.mxu0 %v152
    %282 = vmatprep.subr.mxu0 %v155
    %283 = vmatpush1.msra.mxu0 %v154
    %284 = vmatprep.subr.mxu0 %v157
    %285 = vmatpush1.msra.mxu0 %v156
    %286 = vmatprep.subr.mxu0 %v159
    %287 = vmatpush1.msra.mxu0 %v158
    %288 = vmatprep.subr.mxu0 %v161
    %289 = vmatpush1.msra.mxu0 %v160
    %290 = vmatprep.subr.mxu0 %v163
    %291 = vmatpush1.msra.mxu0 %v162
    %292 = vmatprep.subr.mxu0 %v165
    %293 = vmatpush1.msra.mxu0 %v164
    %294 = vmatprep.subr.mxu0 %v167
    %295 = vmatpush1.msra.mxu0 %v166
    %296 = vmatprep.subr.mxu0 %v169
    %297 = vmatpush1.msra.mxu0 %v168
    %298 = vmatprep.subr.mxu0 %v171
    %299 = vmatpush1.msra.mxu0 %v170
    %300 = vmatprep.subr.mxu0 %v173
    %301 = vmatpush1.msra.mxu0 %v172
    %302 = vmatprep.subr.mxu0 %v175
    %303 = vmatpush1.msra.mxu0 %v174
    %304 = vmatprep.subr.mxu0 %v177
    %305 = vmatpush1.msra.mxu0 %v176
    %306 = vmatprep.subr.mxu0 %v179
    %307 = vmatpush1.msra.mxu0 %v178
    %308 = vmatprep.subr.mxu0 %v181
    %309 = vmatpush1.msra.mxu0 %v180
    %310 = vmatprep.subr.mxu0 %v183
    %311 = vmatpush1.msra.mxu0 %v182
    %312 = vmatprep.mubr.f32.mxu0 %v57
    %313 = vmatmul.mubr.f32.gmra.mrb[0].mxu0 %v56
    %v314 = vpop.f32.mrb[0].mxu0
    %v315 = vadd.f32 %v184, %v314
    %v316 = vpop.f32.mrb[0].mxu0
    %v317 = vadd.f32 %v185, %v316
    %318 = vmatprep.mubr.f32.mxu0 %v59
    %319 = vmatmul.mubr.f32.gmra.mrb[0].mxu0 %v58
    %v320 = vpop.f32.mrb[0].mxu0
    %v321 = vadd.f32 %v186, %v320
    %v322 = vpop.f32.mrb[0].mxu0
    %v323 = vadd.f32 %v187, %v322
    %324 = vmatprep.mubr.f32.mxu0 %v61
    %325 = vmatmul.mubr.f32.gmra.mrb[0].mxu0 %v60
    %v326 = vpop.f32.mrb[0].mxu0
    %v327 = vadd.f32 %v188, %v326
    %v328 = vpop.f32.mrb[0].mxu0
    %v329 = vadd.f32 %v189, %v328
    %330 = vmatprep.mubr.f32.mxu0 %v63
    %331 = vmatmul.mubr.f32.gmra.mrb[0].mxu0 %v62
    %v332 = vpop.f32.mrb[0].mxu0
    %v333 = vadd.f32 %v190, %v332
    %v334 = vpop.f32.mrb[0].mxu0
    %v335 = vadd.f32 %v191, %v334
    %336 = vmatprep.mubr.f32.mxu0 %v65
    %337 = vmatmul.mubr.f32.gmra.mrb[0].mxu0 %v64
    %v338 = vpop.f32.mrb[0].mxu0
    %v339 = vadd.f32 %v192, %v338
    %v340 = vpop.f32.mrb[0].mxu0
    %v341 = vadd.f32 %v193, %v340
    %342 = vmatprep.mubr.f32.mxu0 %v67
    %343 = vmatmul.mubr.f32.gmra.mrb[0].mxu0 %v66
    %v344 = vpop.f32.mrb[0].mxu0
    %v345 = vadd.f32 %v194, %v344
    %v346 = vpop.f32.mrb[0].mxu0
    %v347 = vadd.f32 %v195, %v346
    %348 = vmatprep.mubr.f32.mxu0 %v69
    %349 = vmatmul.mubr.f32.gmra.mrb[0].mxu0 %v68
    %v350 = vpop.f32.mrb[0].mxu0
    %v351 = vadd.f32 %v196, %v350
    %v352 = vpop.f32.mrb[0].mxu0
    %v353 = vadd.f32 %v197, %v352
    %354 = vmatprep.mubr.f32.mxu0 %v71
    %355 = vmatmul.mubr.f32.gmra.mrb[0].mxu0 %v70
    %v356 = vpop.f32.mrb[0].mxu0
    %v357 = vadd.f32 %v198, %v356
    %v358 = vpop.f32.mrb[0].mxu0
    %v359 = vadd.f32 %v199, %v358
    %360 = vmatprep.mubr.f32.mxu0 %v73
    %361 = vmatmul.mubr.f32.gmra.mrb[0].mxu0 %v72
    %v362 = vpop.f32.mrb[0].mxu0
    %v363 = vadd.f32 %v200, %v362
    %v364 = vpop.f32.mrb[0].mxu0
    %v365 = vadd.f32 %v201, %v364
    %366 = vmatprep.mubr.f32.mxu0 %v75
    %367 = vmatmul.mubr.f32.gmra.mrb[0].mxu0 %v74
    %v368 = vpop.f32.mrb[0].mxu0
    %v369 = vadd.f32 %v202, %v368
    %v370 = vpop.f32.mrb[0].mxu0
    %v371 = vadd.f32 %v203, %v370
    %372 = vmatprep.mubr.f32.mxu0 %v77
    %373 = vmatmul.mubr.f32.gmra.mrb[0].mxu0 %v76
    %v374 = vpop.f32.mrb[0].mxu0
    %v375 = vadd.f32 %v204, %v374
    %v376 = vpop.f32.mrb[0].mxu0
    %v377 = vadd.f32 %v205, %v376
    %378 = vmatprep.mubr.f32.mxu0 %v79
    %379 = vmatmul.mubr.f32.gmra.mrb[0].mxu0 %v78
    %v380 = vpop.f32.mrb[0].mxu0
    %v381 = vadd.f32 %v206, %v380
    %v382 = vpop.f32.mrb[0].mxu0
    %v383 = vadd.f32 %v207, %v382
    %384 = vmatprep.mubr.f32.mxu0 %v81
    %385 = vmatmul.mubr.f32.gmra.mrb[0].mxu0 %v80
    %v386 = vpop.f32.mrb[0].mxu0
    %v387 = vadd.f32 %v208, %v386
    %v388 = vpop.f32.mrb[0].mxu0
    %v389 = vadd.f32 %v209, %v388
    %390 = vmatprep.mubr.f32.mxu0 %v83
    %391 = vmatmul.mubr.f32.gmra.mrb[0].mxu0 %v82
    %v392 = vpop.f32.mrb[0].mxu0
    %v393 = vadd.f32 %v210, %v392
    %v394 = vpop.f32.mrb[0].mxu0
    %v395 = vadd.f32 %v211, %v394
    %396 = vmatprep.mubr.f32.mxu0 %v85
    %397 = vmatmul.mubr.f32.gmra.mrb[0].mxu0 %v84
    %v398 = vpop.f32.mrb[0].mxu0
    %v399 = vadd.f32 %v212, %v398
    %v400 = vpop.f32.mrb[0].mxu0
    %v401 = vadd.f32 %v213, %v400
    %402 = vmatprep.mubr.f32.mxu0 %v87
    %403 = vmatmul.mubr.f32.gmra.mrb[0].mxu0 %v86
    %v404 = vpop.f32.mrb[0].mxu0
    %v405 = vadd.f32 %v214, %v404
    %v406 = vpop.f32.mrb[0].mxu0
    %v407 = vadd.f32 %v215, %v406
    %408 = vmatprep.mubr.f32.mxu0 %v89
    %409 = vmatmul.mubr.f32.gmra.mrb[0].mxu0 %v88
    %v410 = vpop.f32.mrb[0].mxu0
    %v411 = vadd.f32 %v216, %v410
    %v412 = vpop.f32.mrb[0].mxu0
    %v413 = vadd.f32 %v217, %v412
    %414 = vmatprep.mubr.f32.mxu0 %v91
    %415 = vmatmul.mubr.f32.gmra.mrb[0].mxu0 %v90
    %v416 = vpop.f32.mrb[0].mxu0
    %v417 = vadd.f32 %v218, %v416
    %v418 = vpop.f32.mrb[0].mxu0
    %v419 = vadd.f32 %v219, %v418
    %420 = vmatprep.mubr.f32.mxu0 %v93
    %421 = vmatmul.mubr.f32.gmra.mrb[0].mxu0 %v92
    %v422 = vpop.f32.mrb[0].mxu0
    %v423 = vadd.f32 %v220, %v422
    %v424 = vpop.f32.mrb[0].mxu0
    %v425 = vadd.f32 %v221, %v424
    %426 = vmatprep.mubr.f32.mxu0 %v95
    %427 = vmatmul.mubr.f32.gmra.mrb[0].mxu0 %v94
    %v428 = vpop.f32.mrb[0].mxu0
    %v429 = vadd.f32 %v222, %v428
    %v430 = vpop.f32.mrb[0].mxu0
    %v431 = vadd.f32 %v223, %v430
    %432 = vmatprep.mubr.f32.mxu0 %v97
    %433 = vmatmul.mubr.f32.gmra.mrb[0].mxu0 %v96
    %v434 = vpop.f32.mrb[0].mxu0
    %v435 = vadd.f32 %v224, %v434
    %v436 = vpop.f32.mrb[0].mxu0
    %v437 = vadd.f32 %v225, %v436
    %438 = vmatprep.mubr.f32.mxu0 %v99
    %439 = vmatmul.mubr.f32.gmra.mrb[0].mxu0 %v98
    %v440 = vpop.f32.mrb[0].mxu0
    %v441 = vadd.f32 %v226, %v440
    %v442 = vpop.f32.mrb[0].mxu0
    %v443 = vadd.f32 %v227, %v442
    %444 = vmatprep.mubr.f32.mxu0 %v101
    %445 = vmatmul.mubr.f32.gmra.mrb[0].mxu0 %v100
    %v446 = vpop.f32.mrb[0].mxu0
    %v447 = vadd.f32 %v228, %v446
    %v448 = vpop.f32.mrb[0].mxu0
    %v449 = vadd.f32 %v229, %v448
    %450 = vmatprep.mubr.f32.mxu0 %v103
    %451 = vmatmul.mubr.f32.gmra.mrb[0].mxu0 %v102
    %v452 = vpop.f32.mrb[0].mxu0
    %v453 = vadd.f32 %v230, %v452
    %v454 = vpop.f32.mrb[0].mxu0
    %v455 = vadd.f32 %v231, %v454
    %456 = vmatprep.mubr.f32.mxu0 %v105
    %457 = vmatmul.mubr.f32.gmra.mrb[0].mxu0 %v104
    %v458 = vpop.f32.mrb[0].mxu0
    %v459 = vadd.f32 %v232, %v458
    %v460 = vpop.f32.mrb[0].mxu0
    %v461 = vadd.f32 %v233, %v460
    %462 = vmatprep.mubr.f32.mxu0 %v107
    %463 = vmatmul.mubr.f32.gmra.mrb[0].mxu0 %v106
    %v464 = vpop.f32.mrb[0].mxu0
    %v465 = vadd.f32 %v234, %v464
    %v466 = vpop.f32.mrb[0].mxu0
    %v467 = vadd.f32 %v235, %v466
    %468 = vmatprep.mubr.f32.mxu0 %v109
    %469 = vmatmul.mubr.f32.gmra.mrb[0].mxu0 %v108
    %v470 = vpop.f32.mrb[0].mxu0
    %v471 = vadd.f32 %v236, %v470
    %v472 = vpop.f32.mrb[0].mxu0
    %v473 = vadd.f32 %v237, %v472
    %474 = vmatprep.mubr.f32.mxu0 %v111
    %475 = vmatmul.mubr.f32.gmra.mrb[0].mxu0 %v110
    %v476 = vpop.f32.mrb[0].mxu0
    %v477 = vadd.f32 %v238, %v476
    %v478 = vpop.f32.mrb[0].mxu0
    %v479 = vadd.f32 %v239, %v478
    %480 = vmatprep.mubr.f32.mxu0 %v113
    %481 = vmatmul.mubr.f32.gmra.mrb[0].mxu0 %v112
    %v482 = vpop.f32.mrb[0].mxu0
    %v483 = vadd.f32 %v240, %v482
    %v484 = vpop.f32.mrb[0].mxu0
    %v485 = vadd.f32 %v241, %v484
    %486 = vmatprep.mubr.f32.mxu0 %v115
    %487 = vmatmul.mubr.f32.gmra.mrb[0].mxu0 %v114
    %v488 = vpop.f32.mrb[0].mxu0
    %v489 = vadd.f32 %v242, %v488
    %v490 = vpop.f32.mrb[0].mxu0
    %v491 = vadd.f32 %v243, %v490
    %492 = vmatprep.mubr.f32.mxu0 %v117
    %493 = vmatmul.mubr.f32.gmra.mrb[0].mxu0 %v116
    %v494 = vpop.f32.mrb[0].mxu0
    %v495 = vadd.f32 %v244, %v494
    %v496 = vpop.f32.mrb[0].mxu0
    %v497 = vadd.f32 %v245, %v496
    %498 = vmatprep.mubr.f32.mxu0 %v119
    %499 = vmatmul.mubr.f32.gmra.mrb[0].mxu0 %v118
    %v500 = vpop.f32.mrb[0].mxu0
    %v501 = vadd.f32 %v246, %v500
    %v502 = vpop.f32.mrb[0].mxu0
    %v503 = vadd.f32 %v247, %v502
    %504 = vdwg.mxu0
    %505 = vst [vmem:[#allocation8] sm:$0xff] %v315
    %506 = vst [vmem:[#allocation8 + $0x8] sm:$0xff] %v317
    %507 = vst [vmem:[#allocation8 + $0x10] sm:$0xff] %v321
    %508 = vst [vmem:[#allocation8 + $0x18] sm:$0xff] %v323
    %509 = vst [vmem:[#allocation8 + $0x20] sm:$0xff] %v327
    %510 = vst [vmem:[#allocation8 + $0x28] sm:$0xff] %v329
    %511 = vst [vmem:[#allocation8 + $0x30] sm:$0xff] %v333
    %512 = vst [vmem:[#allocation8 + $0x38] sm:$0xff] %v335
    %513 = vst [vmem:[#allocation8 + $0x40] sm:$0xff] %v339
    %514 = vst [vmem:[#allocation8 + $0x48] sm:$0xff] %v341
    %515 = vst [vmem:[#allocation8 + $0x50] sm:$0xff] %v345
    %516 = vst [vmem:[#allocation8 + $0x58] sm:$0xff] %v347
    %517 = vst [vmem:[#allocation8 + $0x60] sm:$0xff] %v351
    %518 = vst [vmem:[#allocation8 + $0x68] sm:$0xff] %v353
    %519 = vst [vmem:[#allocation8 + $0x70] sm:$0xff] %v357
    %520 = vst [vmem:[#allocation8 + $0x78] sm:$0xff] %v359
    %521 = vst [vmem:[#allocation8 + $0x80] sm:$0xff] %v363
    %522 = vst [vmem:[#allocation8 + $0x88] sm:$0xff] %v365
    %523 = vst [vmem:[#allocation8 + $0x90] sm:$0xff] %v369
    %524 = vst [vmem:[#allocation8 + $0x98] sm:$0xff] %v371
    %525 = vst [vmem:[#allocation8 + $0xa0] sm:$0xff] %v375
    %526 = vst [vmem:[#allocation8 + $0xa8] sm:$0xff] %v377
    %527 = vst [vmem:[#allocation8 + $0xb0] sm:$0xff] %v381
    %528 = vst [vmem:[#allocation8 + $0xb8] sm:$0xff] %v383
    %529 = vst [vmem:[#allocation8 + $0xc0] sm:$0xff] %v387
    %530 = vst [vmem:[#allocation8 + $0xc8] sm:$0xff] %v389
    %531 = vst [vmem:[#allocation8 + $0xd0] sm:$0xff] %v393
    %532 = vst [vmem:[#allocation8 + $0xd8] sm:$0xff] %v395
    %533 = vst [vmem:[#allocation8 + $0xe0] sm:$0xff] %v399
    %534 = vst [vmem:[#allocation8 + $0xe8] sm:$0xff] %v401
    %535 = vst [vmem:[#allocation8 + $0xf0] sm:$0xff] %v405
    %536 = vst [vmem:[#allocation8 + $0xf8] sm:$0xff] %v407
    %537 = vst [vmem:[#allocation8 + $0x100] sm:$0xff] %v411
    %538 = vst [vmem:[#allocation8 + $0x108] sm:$0xff] %v413
    %539 = vst [vmem:[#allocation8 + $0x110] sm:$0xff] %v417
    %540 = vst [vmem:[#allocation8 + $0x118] sm:$0xff] %v419
    %541 = vst [vmem:[#allocation8 + $0x120] sm:$0xff] %v423
    %542 = vst [vmem:[#allocation8 + $0x128] sm:$0xff] %v425
    %543 = vst [vmem:[#allocation8 + $0x130] sm:$0xff] %v429
    %544 = vst [vmem:[#allocation8 + $0x138] sm:$0xff] %v431
    %545 = vst [vmem:[#allocation8 + $0x140] sm:$0xff] %v435
    %546 = vst [vmem:[#allocation8 + $0x148] sm:$0xff] %v437
    %547 = vst [vmem:[#allocation8 + $0x150] sm:$0xff] %v441
    %548 = vst [vmem:[#allocation8 + $0x158] sm:$0xff] %v443
    %549 = vst [vmem:[#allocation8 + $0x160] sm:$0xff] %v447
    %550 = vst [vmem:[#allocation8 + $0x168] sm:$0xff] %v449
    %551 = vst [vmem:[#allocation8 + $0x170] sm:$0xff] %v453
    %552 = vst [vmem:[#allocation8 + $0x178] sm:$0xff] %v455
    %553 = vst [vmem:[#allocation8 + $0x180] sm:$0xff] %v459
    %554 = vst [vmem:[#allocation8 + $0x188] sm:$0xff] %v461
    %555 = vst [vmem:[#allocation8 + $0x190] sm:$0xff] %v465
    %556 = vst [vmem:[#allocation8 + $0x198] sm:$0xff] %v467
    %557 = vst [vmem:[#allocation8 + $0x1a0] sm:$0xff] %v471
    %558 = vst [vmem:[#allocation8 + $0x1a8] sm:$0xff] %v473
    %559 = vst [vmem:[#allocation8 + $0x1b0] sm:$0xff] %v477
    %560 = vst [vmem:[#allocation8 + $0x1b8] sm:$0xff] %v479
    %561 = vst [vmem:[#allocation8 + $0x1c0] sm:$0xff] %v483
    %562 = vst [vmem:[#allocation8 + $0x1c8] sm:$0xff] %v485
    %563 = vst [vmem:[#allocation8 + $0x1d0] sm:$0xff] %v489
    %564 = vst [vmem:[#allocation8 + $0x1d8] sm:$0xff] %v491
    %565 = vst [vmem:[#allocation8 + $0x1e0] sm:$0xff] %v495
    %566 = vst [vmem:[#allocation8 + $0x1e8] sm:$0xff] %v497
    %567 = vst [vmem:[#allocation8 + $0x1f0] sm:$0xff] %v501
    %568 = vst [vmem:[#allocation8 + $0x1f8] sm:$0xff] %v503
    // Predicated region
    $region26: #{tpu_custom_call.1} parent=1 // pred_check
      _
    $region27: #{tpu_custom_call.1} parent=1 // pred_check_branch
      %570 = sbr.rel (0) target = $region29
    $region28: #{tpu_custom_call.1} parent=1 // pred_region
      %s572 = ssub.s32 8192, 8192
      %573 = vsyncadd [#allocation4], %s572
      %s574 = sshll.u32 [#allocation8], 4
      %s575 = int_to_ptr.vmem [resolvable:$true] %s574
      %580 = dma.vmem_to_hbm [thread:$0]  %s575, 8192, %s3, [#allocation4], 256, 256, 16
    $region29: #{tpu_custom_call.1} parent=1 // pred_fallthru
      _
    // Predicated region
    $region30: #{tpu_custom_call.1} parent=1 // pred_check
      _
    $region31: #{tpu_custom_call.1} parent=1 // pred_check_branch
      %582 = sbr.rel (0) target = $region33
    $region32: #{tpu_custom_call.1} parent=1 // pred_region
      %583 = dma.done [#allocation4], 8192
    $region33: #{tpu_custom_call.1} parent=1 // pred_fallthru
      _
    %584 = vsyncpa [#allocation3], 1
    %585 = vsyncpa [#allocation6], 1
    %586 = vsyncpa [#allocation4], 1

</llo_original>
